<compile_context>
chip_gen: v5e
topology: v5e:2x2
jax: 0.10.0
libtpu: 0.0.40
codegen_flags: <defaults>
</compile_context>

<pallas_src>
import functools

import jax
import jax.numpy as jnp
from jax.experimental import pallas as pl
from jax.experimental.pallas import tpu as pltpu


# ----------------------------------------------------------------------------
# Tiling helpers
# ----------------------------------------------------------------------------
_MAX_TILE_NO = 512          # output-point tile cap  (lane dim of the output)
_MAX_TILE_NI = 512          # input-point  tile cap  (contraction dim)
_VMEM_LIMIT = 32 * 1024 * 1024   # explicit headroom; safe on v5e/v6e/v7x

_BATCH_OFFSET = 64.0        # >> any conv radius: folds batch ids into geometry
_PAD_SENTINEL = 1.0e6       # padded points land far away from everything


def _round_up(x, m):
    return ((x + m - 1) // m) * m


def _tile(n, cap):
    """Tile size: multiple of 128, <= cap (or the 128-rounded n if smaller)."""
    return min(cap, _round_up(n, 128))


# ----------------------------------------------------------------------------
# Pallas kernels
# ----------------------------------------------------------------------------
def _point_conv_kernel(r2, ndims, apply_pre, apply_out,
                       pts_out_ref,   # (D, tile_No)        transposed output points
                       pts_in_ref,    # (tile_Ni, D)         input points
                       f_ref,         # (Cin, tile_Ni)       channel-major features
                       wt_ref,        # (Cout, Cin)          W^T (resident)
                       pre_b_ref,     # (Cin, 1)             fused pre Bias (bn_act_do)
                       out_b_ref,     # (Cout, 1)            fused output bias
                       o_ref,         # (Cout, tile_No)
                       acc_ref,       # VMEM (Cout, tile_No) f32 running sum
                       cnt_ref):      # VMEM (1,    tile_No) f32 running neighbor count
    """out_i = mean_{j: |x_i - x_j| <= r} act(f_j + b) @ W   (channel-major)."""
    k = pl.program_id(1)

    @pl.when(k == 0)
    def _():
        acc_ref[...] = jnp.zeros_like(acc_ref)
        cnt_ref[...] = jnp.zeros_like(cnt_ref)

    # ---- prologue: fused Bias + LeakyReLU(0.2) on the streamed feature tile ----
    f = f_ref[...]                                          # (Cin, tile_Ni)
    if apply_pre:
        f = f + pre_b_ref[...]                              # (Cin,1) lane-broadcast
        f = jnp.where(f > 0.0, f, 0.2 * f)

    # ---- projection fused into aggregation (associativity):
    #      out = (mask @ (f @ W)) / cnt   ->   out^T = (W^T @ f^T) @ mask^T / cnt
    proj = jnp.dot(wt_ref[...], f,
                   preferred_element_type=jnp.float32)      # (Cout, tile_Ni)

    # ---- squared distances on the VPU (D broadcast passes; keeps MXU free) ----
    po = pts_out_ref[...]                                   # (D, tile_No)
    pi = pts_in_ref[...]                                    # (tile_Ni, D)
    d2 = jnp.zeros((pi.shape[0], po.shape[1]), jnp.float32)
    for dd in range(ndims):
        diff = pi[:, dd:dd + 1] - po[dd:dd + 1, :]          # (tile_Ni, tile_No)
        d2 = d2 + diff * diff

    mask_f32 = jnp.where(d2 <= r2, 1.0, 0.0)                # (tile_Ni, tile_No)

    # ---- single big MXU matmul: bf16 inputs, f32 accumulation ----
    acc_ref[...] += jnp.dot(proj.astype(jnp.bfloat16),
                            mask_f32.astype(jnp.bfloat16),
                            preferred_element_type=jnp.float32)
    cnt_ref[...] += jnp.sum(mask_f32, axis=0, keepdims=True)

    # ---- finalize on the last contraction step ----
    @pl.when(k == pl.num_programs(1) - 1)
    def _():
        inv = pl.reciprocal(jnp.maximum(cnt_ref[...], 1.0), approx=True)  # (1,tile_No)
        out = acc_ref[...] * inv
        if apply_out:
            out = out + out_b_ref[...]
        o_ref[...] = out.astype(o_ref.dtype)


def _linear_kernel(x_ref,       # (Cin, tile_N)
                   wt_ref,      # (Cout, Cin)
                   b_ref,       # (Cout, 1)
                   pre_b_ref,   # (Cin, 1)
                   o_ref):      # (Cout, tile_N)
    """Fused bn_act_do (Bias + LeakyReLU(0.2)) + torch.nn.Linear, channel-major."""
    x = x_ref[...] + pre_b_ref[...]
    x = jnp.where(x > 0.0, x, 0.2 * x)
    o_ref[...] = (jnp.dot(wt_ref[...], x, preferred_element_type=jnp.float32)
                  + b_ref[...])


# ----------------------------------------------------------------------------
# Kernel wrappers
# ----------------------------------------------------------------------------
def point_conv(pts_out, pts_in, f_in_cm, w, radius, pre_bias=None, out_bias=None):
    """Radius-ball mean conv.  Features are channel-major (Cin, Ni) -> (Cout, No).

    Batch separation is already folded into the point coordinates by the caller.
    """
    no, ndims = pts_out.shape
    ni = pts_in.shape[0]
    cin, cout = w.shape
    assert f_in_cm.shape == (cin, ni)

    t_no = _tile(no, _MAX_TILE_NO)
    t_ni = _tile(ni, _MAX_TILE_NI)
    no_p = _round_up(no, t_no)
    ni_p = _round_up(ni, t_ni)

    # Pad: output points far negative, input points far positive -> padded rows
    # never fall inside any radius; padded output columns are sliced off below.
    po = jnp.pad(pts_out, ((0, no_p - no), (0, 0)),
                 constant_values=-_PAD_SENTINEL).T                      # (D, no_p)
    pi = jnp.pad(pts_in, ((0, ni_p - ni), (0, 0)),
                 constant_values=_PAD_SENTINEL)                         # (ni_p, D)
    fi = jnp.pad(f_in_cm, ((0, 0), (0, ni_p - ni)))                     # (cin, ni_p)

    wt = w.T.astype(jnp.float32)                                        # (cout, cin)
    pb = (jnp.zeros((cin, 1), jnp.float32) if pre_bias is None
          else pre_bias.reshape(cin, 1).astype(jnp.float32))
    ob = (jnp.zeros((cout, 1), jnp.float32) if out_bias is None
          else out_bias.reshape(cout, 1).astype(jnp.float32))

    kern = functools.partial(_point_conv_kernel, float(radius) ** 2, ndims,
                             pre_bias is not None, out_bias is not None)

    out = pl.pallas_call(
        kern,
        out_shape=jax.ShapeDtypeStruct((cout, no_p), jnp.float32),
        grid_spec=pltpu.PrefetchScalarGridSpec(
            num_scalar_prefetch=0,
            grid=(no_p // t_no, ni_p // t_ni),
            in_specs=[
                pl.BlockSpec((ndims, t_no), lambda i, k: (0, i)),   # pts_out^T
                pl.BlockSpec((t_ni, ndims), lambda i, k: (k, 0)),   # pts_in
                pl.BlockSpec((cin, t_ni), lambda i, k: (0, k)),     # features^T
                pl.BlockSpec((cout, cin), lambda i, k: (0, 0)),     # W^T (resident)
                pl.BlockSpec((cin, 1), lambda i, k: (0, 0)),        # pre bias
                pl.BlockSpec((cout, 1), lambda i, k: (0, 0)),       # out bias
            ],
            out_specs=pl.BlockSpec((cout, t_no), lambda i, k: (0, i)),
            scratch_shapes=[pltpu.VMEM((cout, t_no), jnp.float32),
                            pltpu.VMEM((1, t_no), jnp.float32)],
        ),
        compiler_params=pltpu.CompilerParams(
            dimension_semantics=("parallel", "arbitrary"),
            vmem_limit_bytes=_VMEM_LIMIT,
        ),
    )(po, pi, fi, wt, pb, ob)
    return out[:, :no]


def linear(x_cm, w, b, pre_bias):
    """Fused bn_act_do + Linear, channel-major: (Cin, N) -> (Cout, N)."""
    cin, n = x_cm.shape
    cout = w.shape[1]
    t = _tile(n, _MAX_TILE_NO)
    n_p = _round_up(n, t)
    xp = jnp.pad(x_cm, ((0, 0), (0, n_p - n)))

    out = pl.pallas_call(
        _linear_kernel,
        out_shape=jax.ShapeDtypeStruct((cout, n_p), jnp.float32),
        grid_spec=pltpu.PrefetchScalarGridSpec(
            num_scalar_prefetch=0,
            grid=(n_p // t,),
            in_specs=[
                pl.BlockSpec((cin, t), lambda i: (0, i)),
                pl.BlockSpec((cout, cin), lambda i: (0, 0)),
                pl.BlockSpec((cout, 1), lambda i: (0, 0)),
                pl.BlockSpec((cin, 1), lambda i: (0, 0)),
            ],
            out_specs=pl.BlockSpec((cout, t), lambda i: (0, i)),
        ),
        compiler_params=pltpu.CompilerParams(
            dimension_semantics=("parallel",),
            vmem_limit_bytes=_VMEM_LIMIT,
        ),
    )(xp, w.T.astype(jnp.float32), b.reshape(cout, 1).astype(jnp.float32),
      pre_bias.reshape(cin, 1).astype(jnp.float32))
    return out[:, :n]


# ----------------------------------------------------------------------------
# JAX glue: voxel-grid point pooling (pccnn_lib.pc.PointPooling analog)
# ----------------------------------------------------------------------------
def grid_pool(pts, bids, cell_size):
    """Average-pool points into voxel cells of size `cell_size` (per batch).

    Returns (pool_pts, pool_bids, pool_tensor_fn).  Runs eagerly (dynamic #cells).
    """
    # TODO(synk): key packing assumes floor(pts/cell_size) in [-32, 31]; fine for the
    #   unit-cube demo, collides for wide coordinate ranges.
    cells = jnp.clip(jnp.floor(pts / cell_size).astype(jnp.int32) + 32, 0, 63)
    key = bids.astype(jnp.int32)
    for d in range(pts.shape[1]):
        key = key * 64 + cells[:, d]
    uniq, inv = jnp.unique(key, return_inverse=True)
    inv = inv.reshape(-1)
    num_seg = int(uniq.shape[0])
    counts = jax.ops.segment_sum(jnp.ones((pts.shape[0],), jnp.float32),
                                 inv, num_segments=num_seg)

    def pool_tensor(t):          # t is (N, C) point-major
        s = jax.ops.segment_sum(t, inv, num_segments=num_seg)
        return s / counts[:, None]

    pool_pts = pool_tensor(pts)
    pool_bids = jnp.round(
        pool_tensor(bids.astype(jnp.float32)[:, None]))[:, 0].astype(jnp.int32)
    return pool_pts, pool_bids, pool_tensor


# ----------------------------------------------------------------------------
# Model configuration + deterministic parameters
# ----------------------------------------------------------------------------
CONFIG = dict(
    num_dims=3,
    num_in_features=4,
    num_out_features=6,
    num_levels=2,
    num_blocks_enc=[1, 1],
    num_blocks_dec=[1],
    pooling_radii=[0.15, 0.3],
    conv_radii=[0.3, 0.6],
    feature_sizes=[16, 32],
    first_pooling_features=8,
    first_pooling_radius=0.15,
    last_upsampling_radius=0.3,
    use_batch_norm=False,      # bn_act_do -> Bias + LeakyReLU(0.2)
    act_funct='leaky_relu',
    drop_out=0.0,
    pdf_bandwidth=0.2,
    pooling_method='avg',
    max_neighbors=16,
)


def init_params(key, cfg):
    ks = iter(jax.random.split(key, 32))

    def w(shape):
        return (0.1 * jax.random.normal(next(ks), shape)).astype(jnp.float32)

    def b(n):
        return jnp.zeros((1, n), jnp.float32)

    f0 = cfg['first_pooling_features']
    fs = cfg['feature_sizes']
    p = {}
    # first pooling conv: num_in_features -> first_pooling_features
    p['first_conv_w'] = w((cfg['num_in_features'], f0))
    # encoder level 0
    p['enc0_pre_bias'] = b(f0)
    p['enc0_lin_w'] = w((f0, fs[0]));  p['enc0_lin_b'] = b(fs[0])
    p['enc0_blk0_bias'] = b(fs[0]);    p['enc0_blk0_conv_w'] = w((fs[0], fs[0]))
    # encoder level 1
    p['enc1_pre_bias'] = b(fs[0])
    p['enc1_lin_w'] = w((fs[0], fs[1])); p['enc1_lin_b'] = b(fs[1])
    p['enc1_blk0_bias'] = b(fs[1]);      p['enc1_blk0_conv_w'] = w((fs[1], fs[1]))
    # decoder level 0
    p['dec0_up_bias'] = b(fs[1]);        p['dec0_up_conv_w'] = w((fs[1], fs[0]))
    p['dec0_cat_bias'] = b(2 * fs[0])
    p['dec0_lin_w'] = w((2 * fs[0], fs[0])); p['dec0_lin_b'] = b(fs[0])
    p['dec0_blk0_bias'] = b(fs[0]);      p['dec0_blk0_conv_w'] = w((fs[0], fs[0]))
    # last upsampling
    p['last_pre_bias'] = b(fs[0])
    p['last_conv_w'] = w((fs[0], cfg['num_out_features']))
    p['last_bias'] = jnp.zeros((1, cfg['num_out_features']), jnp.float32)  # fill_(0.0)
    return p


# ----------------------------------------------------------------------------
# Forward pass (mirrors SegmentationUNetModel.forward for the config above)
# ----------------------------------------------------------------------------
def segmentation_unet_forward(params, cfg, pts_in, bids_in, feats_in,
                              pts_out, bids_out):
    # Fold batch ids into the geometry: different batches live >> radius apart,
    # so the radius mask never crosses batches and no batch-id compare is needed.
    def shift(pts, bids):
        return pts + bids.astype(jnp.float32)[:, None] * _BATCH_OFFSET

    sp_in = shift(pts_in, bids_in)
    sp_out = shift(pts_out, bids_out)

    f = feats_in.T                                  # channel-major (Cin, N)

    # ---------------- Encoder level 0 ----------------
    pool0_pts, pool0_bids, _ = grid_pool(pts_in, bids_in, cfg['pooling_radii'][0])
    sp_p0 = shift(pool0_pts, pool0_bids)

    r_first = cfg['first_pooling_radius'] * 1.5
    f = point_conv(sp_p0, sp_in, f, params['first_conv_w'], r_first)

    # bn_act_do + Linear (fused)
    f = linear(f, params['enc0_lin_w'], params['enc0_lin_b'],
               params['enc0_pre_bias'])

    # bn_act_do + conv (fused prologue)
    f = point_conv(sp_p0, sp_p0, f, params['enc0_blk0_conv_w'],
                   cfg['conv_radii'][0], pre_bias=params['enc0_blk0_bias'])
    skip0 = f

    # ---------------- Encoder level 1 ----------------
    pool1_pts, pool1_bids, pool1_fn = grid_pool(pool0_pts, pool0_bids,
                                                cfg['pooling_radii'][1])
    sp_p1 = shift(pool1_pts, pool1_bids)

    f = pool1_fn(f.T).T                              # pooled features (avg)
    f = linear(f, params['enc1_lin_w'], params['enc1_lin_b'],
               params['enc1_pre_bias'])
    f = point_conv(sp_p1, sp_p1, f, params['enc1_blk0_conv_w'],
                   cfg['conv_radii'][1], pre_bias=params['enc1_blk0_bias'])

    # ---------------- Decoder level 0 ----------------
    f = point_conv(sp_p0, sp_p1, f, params['dec0_up_conv_w'],
                   cfg['conv_radii'][0], pre_bias=params['dec0_up_bias'])

    f = jnp.concatenate((f, skip0), axis=0)          # channel concat (skip link)
    f = linear(f, params['dec0_lin_w'], params['dec0_lin_b'],
               params['dec0_cat_bias'])
    f = point_conv(sp_p0, sp_p0, f, params['dec0_blk0_conv_w'],
                   cfg['conv_radii'][0], pre_bias=params['dec0_blk0_bias'])

    # ---------------- Last upsampling ----------------
    f = point_conv(sp_out, sp_p0, f, params['last_conv_w'],
                   cfg['last_upsampling_radius'],
                   pre_bias=params['last_pre_bias'],
                   out_bias=params['last_bias'])
    return f.T                                       # back to point-major (N, Cout)


# ----------------------------------------------------------------------------
if __name__ == "__main__":
    key = jax.random.PRNGKey(0)
    k_pts, k_feat, k_par = jax.random.split(key, 3)

    B, N_PER_BATCH, D = 2, 32, CONFIG['num_dims']
    N = B * N_PER_BATCH
    pts_in = jax.random.uniform(k_pts, (N, D), dtype=jnp.float32)            # in [0,1)
    bids_in = jnp.repeat(jnp.arange(B, dtype=jnp.int32), N_PER_BATCH)        # (N,)
    feats_in = jax.random.normal(k_feat, (N, CONFIG['num_in_features']),
                                 dtype=jnp.float32)
    # p_pc_out == p_pc_in (per-input-point segmentation output)
    pts_out, bids_out = pts_in, bids_in

    params = init_params(k_par, CONFIG)

    out = segmentation_unet_forward(params, CONFIG, pts_in, bids_in, feats_in,
                                    pts_out, bids_out)
    out = jax.block_until_ready(out)
    assert out.shape == (N, CONFIG['num_out_features'])
    assert bool(jnp.all(jnp.isfinite(out)))
    print("KERNEL_OK")
</pallas_src>

<mosaic_0001>
module attributes {stable_mosaic.version = 11 : i64} {
  func.func @_point_conv_kernel(%arg0: i32, %arg1: i32, %arg2: memref<3x128xf32, #tpu.memory_space<vmem>>, %arg3: memref<128x3xf32, #tpu.memory_space<vmem>>, %arg4: memref<4x128xf32, #tpu.memory_space<vmem>>, %arg5: memref<8x4xf32, #tpu.memory_space<vmem>>, %arg6: memref<4x1xf32, #tpu.memory_space<vmem>>, %arg7: memref<8x1xf32, #tpu.memory_space<vmem>>, %arg8: memref<8x128xf32, #tpu.memory_space<vmem>>, %arg9: memref<8x128xf32, #tpu.memory_space<vmem>>, %arg10: memref<1x128xf32, #tpu.memory_space<vmem>>) attributes {dimension_semantics = [#tpu.dimension_semantics<parallel>, #tpu.dimension_semantics<arbitrary>], iteration_bounds = array<i64: 1, 1>, scalar_prefetch = 0 : i64, scratch_operands = 2 : i64, tpu.core_type = #tpu.core_type<tc>, window_params = [{transform_indices = @transform_0, window_bounds = array<i64: 3, 128>}, {transform_indices = @transform_1, window_bounds = array<i64: 128, 3>}, {transform_indices = @transform_2, window_bounds = array<i64: 4, 128>}, {pipeline_mode = #tpu.pipeline_mode<synchronous>, transform_indices = @transform_3, window_bounds = array<i64: 8, 4>}, {pipeline_mode = #tpu.pipeline_mode<synchronous>, transform_indices = @transform_4, window_bounds = array<i64: 4, 1>}, {pipeline_mode = #tpu.pipeline_mode<synchronous>, transform_indices = @transform_5, window_bounds = array<i64: 8, 1>}, {transform_indices = @transform_6, window_bounds = array<i64: 8, 128>}]} {
    %c0_i32 = arith.constant 0 : i32
    %0 = arith.cmpi eq, %arg1, %c0_i32 : i32
    %1 = arith.extui %0 : i1 to i32
    %c0_i32_0 = arith.constant 0 : i32
    %2 = arith.cmpi ne, %1, %c0_i32_0 : i32
    scf.if %2 {
      %cst_24 = arith.constant 0.000000e+00 : f32
      %49 = vector.broadcast %cst_24 : f32 to vector<8x128xf32>
      %c0_25 = arith.constant 0 : index
      %c0_26 = arith.constant 0 : index
      %50 = vector.load %arg9[%c0_25, %c0_26] : memref<8x128xf32, #tpu.memory_space<vmem>>, vector<8x128xf32>
      tpu.vector_store %arg9[%c0_25, %c0_26], %49 {strides = array<i32>} : memref<8x128xf32, #tpu.memory_space<vmem>>, vector<8x128xf32>,
      %cst_27 = arith.constant 0.000000e+00 : f32
      %51 = vector.broadcast %cst_27 : f32 to vector<1x128xf32>
      %c0_28 = arith.constant 0 : index
      %c0_29 = arith.constant 0 : index
      %52 = vector.load %arg10[%c0_28, %c0_29] : memref<1x128xf32, #tpu.memory_space<vmem>>, vector<1x128xf32>
      tpu.vector_store %arg10[%c0_28, %c0_29], %51 {strides = array<i32>} : memref<1x128xf32, #tpu.memory_space<vmem>>, vector<1x128xf32>,
    } else {
    }
    %c0 = arith.constant 0 : index
    %c0_1 = arith.constant 0 : index
    %3 = vector.load %arg4[%c0, %c0_1] : memref<4x128xf32, #tpu.memory_space<vmem>>, vector<4x128xf32>
    %c0_2 = arith.constant 0 : index
    %c0_3 = arith.constant 0 : index
    %4 = vector.load %arg5[%c0_2, %c0_3] : memref<8x4xf32, #tpu.memory_space<vmem>>, vector<8x4xf32>
    %cst = arith.constant dense<0.000000e+00> : vector<8x128xf32>
    %5 = tpu.matmul %4, %3, %cst {dimension_numbers = #tpu.dot_dimension_numbers<[1], [0], [0], [1], [0, 0, 1, 1], [], []>} : vector<8x4xf32>, vector<4x128xf32>, vector<8x128xf32> -> vector<8x128xf32>
    %c0_4 = arith.constant 0 : index
    %c0_5 = arith.constant 0 : index
    %6 = vector.load %arg2[%c0_4, %c0_5] : memref<3x128xf32, #tpu.memory_space<vmem>>, vector<3x128xf32>
    %c0_6 = arith.constant 0 : index
    %c0_7 = arith.constant 0 : index
    %7 = vector.load %arg3[%c0_6, %c0_7] : memref<128x3xf32, #tpu.memory_space<vmem>>, vector<128x3xf32>
    %cst_8 = arith.constant 0.000000e+00 : f32
    %8 = vector.broadcast %cst_8 : f32 to vector<128x128xf32>
    %9 = vector.extract_strided_slice %7 {offsets = [0, 0], sizes = [128, 1], strides = [1, 1]} : vector<128x3xf32> to vector<128x1xf32>
    %10 = vector.extract_strided_slice %6 {offsets = [0, 0], sizes = [1, 128], strides = [1, 1]} : vector<3x128xf32> to vector<1x128xf32>
    %11 = vector.broadcast %9 : vector<128x1xf32> to vector<128x128xf32>
    %12 = vector.broadcast %10 : vector<1x128xf32> to vector<128x128xf32>
    %13 = arith.subf %11, %12 : vector<128x128xf32>
    %14 = arith.mulf %13, %13 : vector<128x128xf32>
    %15 = arith.addf %8, %14 : vector<128x128xf32>
    %16 = vector.extract_strided_slice %7 {offsets = [0, 1], sizes = [128, 1], strides = [1, 1]} : vector<128x3xf32> to vector<128x1xf32>
    %17 = vector.extract_strided_slice %6 {offsets = [1, 0], sizes = [1, 128], strides = [1, 1]} : vector<3x128xf32> to vector<1x128xf32>
    %18 = vector.broadcast %16 : vector<128x1xf32> to vector<128x128xf32>
    %19 = vector.broadcast %17 : vector<1x128xf32> to vector<128x128xf32>
    %20 = arith.subf %18, %19 : vector<128x128xf32>
    %21 = arith.mulf %20, %20 : vector<128x128xf32>
    %22 = arith.addf %15, %21 : vector<128x128xf32>
    %23 = vector.extract_strided_slice %7 {offsets = [0, 2], sizes = [128, 1], strides = [1, 1]} : vector<128x3xf32> to vector<128x1xf32>
    %24 = vector.extract_strided_slice %6 {offsets = [2, 0], sizes = [1, 128], strides = [1, 1]} : vector<3x128xf32> to vector<1x128xf32>
    %25 = vector.broadcast %23 : vector<128x1xf32> to vector<128x128xf32>
    %26 = vector.broadcast %24 : vector<1x128xf32> to vector<128x128xf32>
    %27 = arith.subf %25, %26 : vector<128x128xf32>
    %28 = arith.mulf %27, %27 : vector<128x128xf32>
    %29 = arith.addf %22, %28 : vector<128x128xf32>
    %cst_9 = arith.constant 5.062500e-02 : f32
    %30 = vector.broadcast %cst_9 : f32 to vector<128x128xf32>
    %31 = arith.cmpf ole, %29, %30 : vector<128x128xf32>
    %cst_10 = arith.constant 1.000000e+00 : f32
    %cst_11 = arith.constant 0.000000e+00 : f32
    %32 = vector.broadcast %cst_10 : f32 to vector<128x128xf32>
    %33 = vector.broadcast %cst_11 : f32 to vector<128x128xf32>
    %34 = arith.select %31, %32, %33 : vector<128x128xi1>, vector<128x128xf32>
    %c0_12 = arith.constant 0 : index
    %c0_13 = arith.constant 0 : index
    %35 = vector.load %arg9[%c0_12, %c0_13] : memref<8x128xf32, #tpu.memory_space<vmem>>, vector<8x128xf32>
    %36 = arith.truncf %5 : vector<8x128xf32> to vector<8x128xbf16>
    %37 = arith.truncf %34 : vector<128x128xf32> to vector<128x128xbf16>
    %cst_14 = arith.constant dense<0.000000e+00> : vector<8x128xf32>
    %38 = tpu.matmul %36, %37, %cst_14 {dimension_numbers = #tpu.dot_dimension_numbers<[1], [0], [0], [1], [0, 0, 1, 1], [], []>} : vector<8x128xbf16>, vector<128x128xbf16>, vector<8x128xf32> -> vector<8x128xf32>
    %39 = arith.addf %35, %38 : vector<8x128xf32>
    %c0_15 = arith.constant 0 : index
    %c0_16 = arith.constant 0 : index
    %40 = vector.load %arg9[%c0_15, %c0_16] : memref<8x128xf32, #tpu.memory_space<vmem>>, vector<8x128xf32>
    tpu.vector_store %arg9[%c0_15, %c0_16], %39 {strides = array<i32>} : memref<8x128xf32, #tpu.memory_space<vmem>>, vector<8x128xf32>,
    %c0_17 = arith.constant 0 : index
    %c0_18 = arith.constant 0 : index
    %41 = vector.load %arg10[%c0_17, %c0_18] : memref<1x128xf32, #tpu.memory_space<vmem>>, vector<1x128xf32>
    %cst_19 = arith.constant dense<0.000000e+00> : vector<128xf32>
    %42 = vector.multi_reduction <add>, %34, %cst_19 [0] : vector<128x128xf32> to vector<128xf32>
    %43 = vector.shape_cast %42 : vector<128xf32> to vector<1x128xf32>
    %44 = arith.addf %41, %43 : vector<1x128xf32>
    %c0_20 = arith.constant 0 : index
    %c0_21 = arith.constant 0 : index
    %45 = vector.load %arg10[%c0_20, %c0_21] : memref<1x128xf32, #tpu.memory_space<vmem>>, vector<1x128xf32>
    tpu.vector_store %arg10[%c0_20, %c0_21], %44 {strides = array<i32>} : memref<1x128xf32, #tpu.memory_space<vmem>>, vector<1x128xf32>,
    %c0_i32_22 = arith.constant 0 : i32
    %46 = arith.cmpi eq, %arg1, %c0_i32_22 : i32
    %47 = arith.extui %46 : i1 to i32
    %c0_i32_23 = arith.constant 0 : i32
    %48 = arith.cmpi ne, %47, %c0_i32_23 : i32
    scf.if %48 {
      %c0_24 = arith.constant 0 : index
      %c0_25 = arith.constant 0 : index
      %49 = vector.load %arg10[%c0_24, %c0_25] : memref<1x128xf32, #tpu.memory_space<vmem>>, vector<1x128xf32>
      %cst_26 = arith.constant 1.000000e+00 : f32
      %50 = vector.broadcast %cst_26 : f32 to vector<1x128xf32>
      %51 = arith.maximumf %49, %50 : vector<1x128xf32>
      %52 = tpu.reciprocal %51 {approx = true} : vector<1x128xf32> -> vector<1x128xf32>
      %c0_27 = arith.constant 0 : index
      %c0_28 = arith.constant 0 : index
      %53 = vector.load %arg9[%c0_27, %c0_28] : memref<8x128xf32, #tpu.memory_space<vmem>>, vector<8x128xf32>
      %54 = vector.broadcast %52 : vector<1x128xf32> to vector<8x128xf32>
      %55 = arith.mulf %53, %54 : vector<8x128xf32>
      %c0_29 = arith.constant 0 : index
      %c0_30 = arith.constant 0 : index
      %56 = vector.load %arg8[%c0_29, %c0_30] : memref<8x128xf32, #tpu.memory_space<vmem>>, vector<8x128xf32>
      tpu.vector_store %arg8[%c0_29, %c0_30], %55 {strides = array<i32>} : memref<8x128xf32, #tpu.memory_space<vmem>>, vector<8x128xf32>,
    } else {
    }
    return
  }
  func.func @transform_0(%arg0: i32, %arg1: i32) -> (i32, i32) {
    %c0_i32 = arith.constant 0 : i32
    %c0_i32_0 = arith.constant 0 : i32
    return %c0_i32, %arg0 : i32, i32
  }
  func.func @transform_1(%arg0: i32, %arg1: i32) -> (i32, i32) {
    %c0_i32 = arith.constant 0 : i32
    %c0_i32_0 = arith.constant 0 : i32
    return %arg1, %c0_i32 : i32, i32
  }
  func.func @transform_2(%arg0: i32, %arg1: i32) -> (i32, i32) {
    %c0_i32 = arith.constant 0 : i32
    %c0_i32_0 = arith.constant 0 : i32
    return %c0_i32, %arg1 : i32, i32
  }
  func.func @transform_3(%arg0: i32, %arg1: i32) -> (i32, i32) {
    %c0_i32 = arith.constant 0 : i32
    %c0_i32_0 = arith.constant 0 : i32
    %c0_i32_1 = arith.constant 0 : i32
    return %c0_i32, %c0_i32_0 : i32, i32
  }
  func.func @transform_4(%arg0: i32, %arg1: i32) -> (i32, i32) {
    %c0_i32 = arith.constant 0 : i32
    %c0_i32_0 = arith.constant 0 : i32
    %c0_i32_1 = arith.constant 0 : i32
    return %c0_i32, %c0_i32_0 : i32, i32
  }
  func.func @transform_5(%arg0: i32, %arg1: i32) -> (i32, i32) {
    %c0_i32 = arith.constant 0 : i32
    %c0_i32_0 = arith.constant 0 : i32
    %c0_i32_1 = arith.constant 0 : i32
    return %c0_i32, %c0_i32_0 : i32, i32
  }
  func.func @transform_6(%arg0: i32, %arg1: i32) -> (i32, i32) {
    %c0_i32 = arith.constant 0 : i32
    %c0_i32_0 = arith.constant 0 : i32
    return %c0_i32, %arg0 : i32, i32
  }
}

</mosaic_0001>

<llo_original>
// kernel: tpu_custom_call.1
$region0: #{tpu_custom_call.1}
  #allocation0 [shape = 'u32[]', space=smem, size = 0x4, offset = 0x4, fixed_abs, tag = 'smem constant byte address 0x4 - core index']
  #allocation1 [shape = 'u32[72,128]{1,0:T(1,128)}', space=vmem, size = 0x9000, scoped, tag = 'internal scratch']
  #allocation2 [shape = 'f32[8,128]{1,0:T(8,128)}', space=vmem, size = 0x1000, scoped, tag = 'scratch operand']
  #allocation3 [shape = 'f32[1,128]{1,0:T(1,128)}', space=vmem, size = 0x200, scoped, tag = 'scratch operand']
  %s0 = inlined_call_operand.vmem [shape: f32[3,128], index: 0, kind: input, shape index: {}]
  %s1 = inlined_call_operand.vmem [shape: f32[128,3], index: 1, kind: input, shape index: {}]
  %s2 = inlined_call_operand.vmem [shape: f32[4,128], index: 2, kind: input, shape index: {}]
  %s3 = inlined_call_operand.vmem [shape: f32[8,4], index: 3, kind: input, shape index: {}]
  %s4 = inlined_call_operand.vmem [shape: f32[4,1], index: 4, kind: input, shape index: {}]
  %s5 = inlined_call_operand.vmem [shape: f32[8,1], index: 5, kind: input, shape index: {}]
  %s6 = inlined_call_operand.hbm [shape: f32[8,128], index: 6, kind: output, shape index: {}]
  %s7 = sld [smem:[#allocation0]]
  $region42: #{tpu_custom_call.1} parent=0
    _
  %s9 = ssub.s32 1, %s7
  %s10 = scalar_select 0, %s9, %s7
  $region1: #{tpu_custom_call.1} parent=0
    #allocation4 [shape = 'u8[4096]{0}', space=vmem, size = 0x1000, scoped, tag = 'output window, operand 0, single buffered']
    #allocation5 [shape = 's32[1]{0}', space=sflag, size = 0x4, scoped, tag = 'scoped memory for tpu_custom_call.1']
    %11 = vsyncpa [#allocation5], 0
    // Predicated region
    $region2: #{tpu_custom_call.1} parent=1 // pred_check
      _
    $region3: #{tpu_custom_call.1} parent=1 // pred_check_branch
      %13 = sbr.rel (0) target = $region5
    $region4: #{tpu_custom_call.1} parent=1 // pred_region
      _
    $region5: #{tpu_custom_call.1} parent=1 // pred_fallthru
      _
    // Predicated region
    $region6: #{tpu_custom_call.1} parent=1 // pred_check
      _
    $region7: #{tpu_custom_call.1} parent=1 // pred_check_branch
      %15 = sbr.rel (0) target = $region9
    $region8: #{tpu_custom_call.1} parent=1 // pred_region
      _
    $region9: #{tpu_custom_call.1} parent=1 // pred_fallthru
      _
    // Predicated region
    $region10: #{tpu_custom_call.1} parent=1 // pred_check
      _
    $region11: #{tpu_custom_call.1} parent=1 // pred_check_branch
      %17 = sbr.rel (0) target = $region13
    $region12: #{tpu_custom_call.1} parent=1 // pred_region
      _
    $region13: #{tpu_custom_call.1} parent=1 // pred_fallthru
      _
    // Predicated region
    $region14: #{tpu_custom_call.1} parent=1 // pred_check
      _
    $region15: #{tpu_custom_call.1} parent=1 // pred_check_branch
      %19 = sbr.rel (0) target = $region17
    $region16: #{tpu_custom_call.1} parent=1 // pred_region
      _
    $region17: #{tpu_custom_call.1} parent=1 // pred_fallthru
      _
    // Predicated region
    $region18: #{tpu_custom_call.1} parent=1 // pred_check
      _
    $region19: #{tpu_custom_call.1} parent=1 // pred_check_branch
      %21 = sbr.rel (0) target = $region21
    $region20: #{tpu_custom_call.1} parent=1 // pred_region
      _
    $region21: #{tpu_custom_call.1} parent=1 // pred_fallthru
      _
    // Predicated region
    $region22: #{tpu_custom_call.1} parent=1 // pred_check
      _
    $region23: #{tpu_custom_call.1} parent=1 // pred_check_branch
      %23 = sbr.rel (0) target = $region25
    $region24: #{tpu_custom_call.1} parent=1 // pred_region
      _
    $region25: #{tpu_custom_call.1} parent=1 // pred_fallthru
      _
    %p24 = scmp.eq.s32.totalorder 0, 0
    // Predicated region
    $region26: #{tpu_custom_call.1} parent=1 // pred_check
      %p25 = pneg %p24
    $region27: #{tpu_custom_call.1} parent=1 // pred_check_branch
      %27 = sbr.rel (%p25) target = $region29
    $region28: #{tpu_custom_call.1} parent=1 // pred_region
      %28 = vst [vmem:[#allocation2] sm:$0xff] 0.0
      %29 = vst [vmem:[#allocation3] sm:$0x1] 0.0
    $region29: #{tpu_custom_call.1} parent=1 // pred_fallthru
      _
    %v30 = vld [vmem:[%s2] sm:$0xf]
    %v31 = vld [vmem:[%s3] sm:$0xff]
    %vm32 = vcmask 31744
    %v34 = vsel %vm32, %v31, 0
    %vm36 = vcmask 1043456
    %v38 = vsel %vm36, %v30, 0
    %40 = vmatpush.msra.mxu0 0.0
    %41 = vmatpush.msra.mxu0 0.0
    %42 = vmatpush.msra.mxu0 0.0
    %43 = vmatpush.msra.mxu0 0.0
    %44 = vmatpush.msra.mxu0 0.0
    %45 = vmatpush.msra.mxu0 0.0
    %46 = vmatpush.msra.mxu0 0.0
    %47 = vmatpush.msra.mxu0 0.0
    %48 = vmatpush.msra.mxu0 0.0
    %49 = vmatpush.msra.mxu0 0.0
    %50 = vmatpush.msra.mxu0 0.0
    %51 = vmatpush.msra.mxu0 0.0
    %52 = vmatpush.msra.mxu0 0.0
    %53 = vmatpush.msra.mxu0 0.0
    %54 = vmatpush.msra.mxu0 0.0
    %55 = vmatpush.msra.mxu0 %v38
    %56 = vmatmul.f32.gmra.mxu0 %v34
    %v57 = vpop.f32.mrf.mxu0
    %v58 = vadd.f32 0.0, %v57
    %59 = vdwg.mxu0
    %v60 = vld [vmem:[%s0] sm:$0x7]
    %v61 = vld [vmem:[%s1] sm:$0xff]
    %v62 = vld [vmem:[%s1 + $0x8] sm:$0xff]
    %v63 = vld [vmem:[%s1 + $0x10] sm:$0xff]
    %v64 = vld [vmem:[%s1 + $0x18] sm:$0xff]
    %v65 = vld [vmem:[%s1 + $0x20] sm:$0xff]
    %v66 = vld [vmem:[%s1 + $0x28] sm:$0xff]
    %v67 = vld [vmem:[%s1 + $0x30] sm:$0xff]
    %v68 = vld [vmem:[%s1 + $0x38] sm:$0xff]
    %v69 = vld [vmem:[%s1 + $0x40] sm:$0xff]
    %v70 = vld [vmem:[%s1 + $0x48] sm:$0xff]
    %v71 = vld [vmem:[%s1 + $0x50] sm:$0xff]
    %v72 = vld [vmem:[%s1 + $0x58] sm:$0xff]
    %v73 = vld [vmem:[%s1 + $0x60] sm:$0xff]
    %v74 = vld [vmem:[%s1 + $0x68] sm:$0xff]
    %v75 = vld [vmem:[%s1 + $0x70] sm:$0xff]
    %v76 = vld [vmem:[%s1 + $0x78] sm:$0xff]
    %78 = vset.pattern.permute.xlu0 0
    %79 = vperm.xlu0 %78, %v61
    %v80 = vpop.permute.xlu0 %79
    %83 = vset.pattern.permute.xlu0 0
    %84 = vperm.xlu0 %83, %v62
    %v85 = vpop.permute.xlu0 %84
    %88 = vset.pattern.permute.xlu0 0
    %89 = vperm.xlu0 %88, %v63
    %v90 = vpop.permute.xlu0 %89
    %93 = vset.pattern.permute.xlu0 0
    %94 = vperm.xlu0 %93, %v64
    %v95 = vpop.permute.xlu0 %94
    %98 = vset.pattern.permute.xlu0 0
    %99 = vperm.xlu0 %98, %v65
    %v100 = vpop.permute.xlu0 %99
    %103 = vset.pattern.permute.xlu0 0
    %104 = vperm.xlu0 %103, %v66
    %v105 = vpop.permute.xlu0 %104
    %108 = vset.pattern.permute.xlu0 0
    %109 = vperm.xlu0 %108, %v67
    %v110 = vpop.permute.xlu0 %109
    %113 = vset.pattern.permute.xlu0 0
    %114 = vperm.xlu0 %113, %v68
    %v115 = vpop.permute.xlu0 %114
    %118 = vset.pattern.permute.xlu0 0
    %119 = vperm.xlu0 %118, %v69
    %v120 = vpop.permute.xlu0 %119
    %123 = vset.pattern.permute.xlu0 0
    %124 = vperm.xlu0 %123, %v70
    %v125 = vpop.permute.xlu0 %124
    %128 = vset.pattern.permute.xlu0 0
    %129 = vperm.xlu0 %128, %v71
    %v130 = vpop.permute.xlu0 %129
    %133 = vset.pattern.permute.xlu0 0
    %134 = vperm.xlu0 %133, %v72
    %v135 = vpop.permute.xlu0 %134
    %138 = vset.pattern.permute.xlu0 0
    %139 = vperm.xlu0 %138, %v73
    %v140 = vpop.permute.xlu0 %139
    %143 = vset.pattern.permute.xlu0 0
    %144 = vperm.xlu0 %143, %v74
    %v145 = vpop.permute.xlu0 %144
    %148 = vset.pattern.permute.xlu0 0
    %149 = vperm.xlu0 %148, %v75
    %v150 = vpop.permute.xlu0 %149
    %153 = vset.pattern.permute.xlu0 0
    %154 = vperm.xlu0 %153, %v76
    %v155 = vpop.permute.xlu0 %154
    %v157 = vperm.slane %v60, 0
    %v158 = vsub.f32 %v80, %v157
    %v159 = vsub.f32 %v85, %v157
    %v160 = vsub.f32 %v90, %v157
    %v161 = vsub.f32 %v95, %v157
    %v162 = vsub.f32 %v100, %v157
    %v163 = vsub.f32 %v105, %v157
    %v164 = vsub.f32 %v110, %v157
    %v165 = vsub.f32 %v115, %v157
    %v166 = vsub.f32 %v120, %v157
    %v167 = vsub.f32 %v125, %v157
    %v168 = vsub.f32 %v130, %v157
    %v169 = vsub.f32 %v135, %v157
    %v170 = vsub.f32 %v140, %v157
    %v171 = vsub.f32 %v145, %v157
    %v172 = vsub.f32 %v150, %v157
    %v173 = vsub.f32 %v155, %v157
    %v174 = vmul.f32 %v158, %v158
    %v175 = vmul.f32 %v159, %v159
    %v176 = vmul.f32 %v160, %v160
    %v177 = vmul.f32 %v161, %v161
    %v178 = vmul.f32 %v162, %v162
    %v179 = vmul.f32 %v163, %v163
    %v180 = vmul.f32 %v164, %v164
    %v181 = vmul.f32 %v165, %v165
    %v182 = vmul.f32 %v166, %v166
    %v183 = vmul.f32 %v167, %v167
    %v184 = vmul.f32 %v168, %v168
    %v185 = vmul.f32 %v169, %v169
    %v186 = vmul.f32 %v170, %v170
    %v187 = vmul.f32 %v171, %v171
    %v188 = vmul.f32 %v172, %v172
    %v189 = vmul.f32 %v173, %v173
    %v190 = vadd.f32 %v174, 0.0
    %v191 = vadd.f32 %v175, 0.0
    %v192 = vadd.f32 %v176, 0.0
    %v193 = vadd.f32 %v177, 0.0
    %v194 = vadd.f32 %v178, 0.0
    %v195 = vadd.f32 %v179, 0.0
    %v196 = vadd.f32 %v180, 0.0
    %v197 = vadd.f32 %v181, 0.0
    %v198 = vadd.f32 %v182, 0.0
    %v199 = vadd.f32 %v183, 0.0
    %v200 = vadd.f32 %v184, 0.0
    %v201 = vadd.f32 %v185, 0.0
    %v202 = vadd.f32 %v186, 0.0
    %v203 = vadd.f32 %v187, 0.0
    %v204 = vadd.f32 %v188, 0.0
    %v205 = vadd.f32 %v189, 0.0
    %206 = vset.pattern.permute.xlu0 1
    %207 = vperm.xlu0 %206, %v61
    %v208 = vpop.permute.xlu0 %207
    %210 = vset.pattern.permute.xlu0 1
    %211 = vperm.xlu0 %210, %v62
    %v212 = vpop.permute.xlu0 %211
    %214 = vset.pattern.permute.xlu0 1
    %215 = vperm.xlu0 %214, %v63
    %v216 = vpop.permute.xlu0 %215
    %218 = vset.pattern.permute.xlu0 1
    %219 = vperm.xlu0 %218, %v64
    %v220 = vpop.permute.xlu0 %219
    %222 = vset.pattern.permute.xlu0 1
    %223 = vperm.xlu0 %222, %v65
    %v224 = vpop.permute.xlu0 %223
    %226 = vset.pattern.permute.xlu0 1
    %227 = vperm.xlu0 %226, %v66
    %v228 = vpop.permute.xlu0 %227
    %230 = vset.pattern.permute.xlu0 1
    %231 = vperm.xlu0 %230, %v67
    %v232 = vpop.permute.xlu0 %231
    %234 = vset.pattern.permute.xlu0 1
    %235 = vperm.xlu0 %234, %v68
    %v236 = vpop.permute.xlu0 %235
    %238 = vset.pattern.permute.xlu0 1
    %239 = vperm.xlu0 %238, %v69
    %v240 = vpop.permute.xlu0 %239
    %242 = vset.pattern.permute.xlu0 1
    %243 = vperm.xlu0 %242, %v70
    %v244 = vpop.permute.xlu0 %243
    %246 = vset.pattern.permute.xlu0 1
    %247 = vperm.xlu0 %246, %v71
    %v248 = vpop.permute.xlu0 %247
    %250 = vset.pattern.permute.xlu0 1
    %251 = vperm.xlu0 %250, %v72
    %v252 = vpop.permute.xlu0 %251
    %254 = vset.pattern.permute.xlu0 1
    %255 = vperm.xlu0 %254, %v73
    %v256 = vpop.permute.xlu0 %255
    %258 = vset.pattern.permute.xlu0 1
    %259 = vperm.xlu0 %258, %v74
    %v260 = vpop.permute.xlu0 %259
    %262 = vset.pattern.permute.xlu0 1
    %263 = vperm.xlu0 %262, %v75
    %v264 = vpop.permute.xlu0 %263
    %266 = vset.pattern.permute.xlu0 1
    %267 = vperm.xlu0 %266, %v76
    %v268 = vpop.permute.xlu0 %267
    %v270 = vperm.slane %v60, 1
    %v271 = vsub.f32 %v208, %v270
    %v272 = vsub.f32 %v212, %v270
    %v273 = vsub.f32 %v216, %v270
    %v274 = vsub.f32 %v220, %v270
    %v275 = vsub.f32 %v224, %v270
    %v276 = vsub.f32 %v228, %v270
    %v277 = vsub.f32 %v232, %v270
    %v278 = vsub.f32 %v236, %v270
    %v279 = vsub.f32 %v240, %v270
    %v280 = vsub.f32 %v244, %v270
    %v281 = vsub.f32 %v248, %v270
    %v282 = vsub.f32 %v252, %v270
    %v283 = vsub.f32 %v256, %v270
    %v284 = vsub.f32 %v260, %v270
    %v285 = vsub.f32 %v264, %v270
    %v286 = vsub.f32 %v268, %v270
    %v287 = vmul.f32 %v271, %v271
    %v288 = vmul.f32 %v272, %v272
    %v289 = vmul.f32 %v273, %v273
    %v290 = vmul.f32 %v274, %v274
    %v291 = vmul.f32 %v275, %v275
    %v292 = vmul.f32 %v276, %v276
    %v293 = vmul.f32 %v277, %v277
    %v294 = vmul.f32 %v278, %v278
    %v295 = vmul.f32 %v279, %v279
    %v296 = vmul.f32 %v280, %v280
    %v297 = vmul.f32 %v281, %v281
    %v298 = vmul.f32 %v282, %v282
    %v299 = vmul.f32 %v283, %v283
    %v300 = vmul.f32 %v284, %v284
    %v301 = vmul.f32 %v285, %v285
    %v302 = vmul.f32 %v286, %v286
    %v303 = vadd.f32 %v190, %v287
    %v304 = vadd.f32 %v191, %v288
    %v305 = vadd.f32 %v192, %v289
    %v306 = vadd.f32 %v193, %v290
    %v307 = vadd.f32 %v194, %v291
    %v308 = vadd.f32 %v195, %v292
    %v309 = vadd.f32 %v196, %v293
    %v310 = vadd.f32 %v197, %v294
    %v311 = vadd.f32 %v198, %v295
    %v312 = vadd.f32 %v199, %v296
    %v313 = vadd.f32 %v200, %v297
    %v314 = vadd.f32 %v201, %v298
    %v315 = vadd.f32 %v202, %v299
    %v316 = vadd.f32 %v203, %v300
    %v317 = vadd.f32 %v204, %v301
    %v318 = vadd.f32 %v205, %v302
    %319 = vset.pattern.permute.xlu0 2
    %320 = vperm.xlu0 %319, %v61
    %v321 = vpop.permute.xlu0 %320
    %323 = vset.pattern.permute.xlu0 2
    %324 = vperm.xlu0 %323, %v62
    %v325 = vpop.permute.xlu0 %324
    %327 = vset.pattern.permute.xlu0 2
    %328 = vperm.xlu0 %327, %v63
    %v329 = vpop.permute.xlu0 %328
    %331 = vset.pattern.permute.xlu0 2
    %332 = vperm.xlu0 %331, %v64
    %v333 = vpop.permute.xlu0 %332
    %335 = vset.pattern.permute.xlu0 2
    %336 = vperm.xlu0 %335, %v65
    %v337 = vpop.permute.xlu0 %336
    %339 = vset.pattern.permute.xlu0 2
    %340 = vperm.xlu0 %339, %v66
    %v341 = vpop.permute.xlu0 %340
    %343 = vset.pattern.permute.xlu0 2
    %344 = vperm.xlu0 %343, %v67
    %v345 = vpop.permute.xlu0 %344
    %347 = vset.pattern.permute.xlu0 2
    %348 = vperm.xlu0 %347, %v68
    %v349 = vpop.permute.xlu0 %348
    %351 = vset.pattern.permute.xlu0 2
    %352 = vperm.xlu0 %351, %v69
    %v353 = vpop.permute.xlu0 %352
    %355 = vset.pattern.permute.xlu0 2
    %356 = vperm.xlu0 %355, %v70
    %v357 = vpop.permute.xlu0 %356
    %359 = vset.pattern.permute.xlu0 2
    %360 = vperm.xlu0 %359, %v71
    %v361 = vpop.permute.xlu0 %360
    %363 = vset.pattern.permute.xlu0 2
    %364 = vperm.xlu0 %363, %v72
    %v365 = vpop.permute.xlu0 %364
    %367 = vset.pattern.permute.xlu0 2
    %368 = vperm.xlu0 %367, %v73
    %v369 = vpop.permute.xlu0 %368
    %371 = vset.pattern.permute.xlu0 2
    %372 = vperm.xlu0 %371, %v74
    %v373 = vpop.permute.xlu0 %372
    %375 = vset.pattern.permute.xlu0 2
    %376 = vperm.xlu0 %375, %v75
    %v377 = vpop.permute.xlu0 %376
    %379 = vset.pattern.permute.xlu0 2
    %380 = vperm.xlu0 %379, %v76
    %v381 = vpop.permute.xlu0 %380
    %v383 = vperm.slane %v60, 2
    %v384 = vsub.f32 %v321, %v383
    %v385 = vsub.f32 %v325, %v383
    %v386 = vsub.f32 %v329, %v383
    %v387 = vsub.f32 %v333, %v383
    %v388 = vsub.f32 %v337, %v383
    %v389 = vsub.f32 %v341, %v383
    %v390 = vsub.f32 %v345, %v383
    %v391 = vsub.f32 %v349, %v383
    %v392 = vsub.f32 %v353, %v383
    %v393 = vsub.f32 %v357, %v383
    %v394 = vsub.f32 %v361, %v383
    %v395 = vsub.f32 %v365, %v383
    %v396 = vsub.f32 %v369, %v383
    %v397 = vsub.f32 %v373, %v383
    %v398 = vsub.f32 %v377, %v383
    %v399 = vsub.f32 %v381, %v383
    %v400 = vmul.f32 %v384, %v384
    %v401 = vmul.f32 %v385, %v385
    %v402 = vmul.f32 %v386, %v386
    %v403 = vmul.f32 %v387, %v387
    %v404 = vmul.f32 %v388, %v388
    %v405 = vmul.f32 %v389, %v389
    %v406 = vmul.f32 %v390, %v390
    %v407 = vmul.f32 %v391, %v391
    %v408 = vmul.f32 %v392, %v392
    %v409 = vmul.f32 %v393, %v393
    %v410 = vmul.f32 %v394, %v394
    %v411 = vmul.f32 %v395, %v395
    %v412 = vmul.f32 %v396, %v396
    %v413 = vmul.f32 %v397, %v397
    %v414 = vmul.f32 %v398, %v398
    %v415 = vmul.f32 %v399, %v399
    %v416 = vadd.f32 %v303, %v400
    %v417 = vadd.f32 %v304, %v401
    %v418 = vadd.f32 %v305, %v402
    %v419 = vadd.f32 %v306, %v403
    %v420 = vadd.f32 %v307, %v404
    %v421 = vadd.f32 %v308, %v405
    %v422 = vadd.f32 %v309, %v406
    %v423 = vadd.f32 %v310, %v407
    %v424 = vadd.f32 %v311, %v408
    %v425 = vadd.f32 %v312, %v409
    %v426 = vadd.f32 %v313, %v410
    %v427 = vadd.f32 %v314, %v411
    %v428 = vadd.f32 %v315, %v412
    %v429 = vadd.f32 %v316, %v413
    %v430 = vadd.f32 %v317, %v414
    %v431 = vadd.f32 %v318, %v415
    %vm432 = vcmp.le.f32.partialorder %v416, 0.050625
    %vm433 = vcmp.le.f32.partialorder %v417, 0.050625
    %vm434 = vcmp.le.f32.partialorder %v418, 0.050625
    %vm435 = vcmp.le.f32.partialorder %v419, 0.050625
    %vm436 = vcmp.le.f32.partialorder %v420, 0.050625
    %vm437 = vcmp.le.f32.partialorder %v421, 0.050625
    %vm438 = vcmp.le.f32.partialorder %v422, 0.050625
    %vm439 = vcmp.le.f32.partialorder %v423, 0.050625
    %vm440 = vcmp.le.f32.partialorder %v424, 0.050625
    %vm441 = vcmp.le.f32.partialorder %v425, 0.050625
    %vm442 = vcmp.le.f32.partialorder %v426, 0.050625
    %vm443 = vcmp.le.f32.partialorder %v427, 0.050625
    %vm444 = vcmp.le.f32.partialorder %v428, 0.050625
    %vm445 = vcmp.le.f32.partialorder %v429, 0.050625
    %vm446 = vcmp.le.f32.partialorder %v430, 0.050625
    %vm447 = vcmp.le.f32.partialorder %v431, 0.050625
    %v448 = vsel %vm432, 1.0, 0.0
    %v449 = vsel %vm433, 1.0, 0.0
    %v450 = vsel %vm434, 1.0, 0.0
    %v451 = vsel %vm435, 1.0, 0.0
    %v452 = vsel %vm436, 1.0, 0.0
    %v453 = vsel %vm437, 1.0, 0.0
    %v454 = vsel %vm438, 1.0, 0.0
    %v455 = vsel %vm439, 1.0, 0.0
    %v456 = vsel %vm440, 1.0, 0.0
    %v457 = vsel %vm441, 1.0, 0.0
    %v458 = vsel %vm442, 1.0, 0.0
    %v459 = vsel %vm443, 1.0, 0.0
    %v460 = vsel %vm444, 1.0, 0.0
    %v461 = vsel %vm445, 1.0, 0.0
    %v462 = vsel %vm446, 1.0, 0.0
    %v463 = vsel %vm447, 1.0, 0.0
    %v464 = vld [vmem:[#allocation2] sm:$0xff]
    %v465 = vpack.c.bf16 %v58, %v58
    %v466 = vpack.c.bf16 %v449, %v448
    %v467 = vpack.c.bf16 %v451, %v450
    %v468 = vpack.c.bf16 %v453, %v452
    %v469 = vpack.c.bf16 %v455, %v454
    %v470 = vpack.c.bf16 %v457, %v456
    %v471 = vpack.c.bf16 %v459, %v458
    %v472 = vpack.c.bf16 %v461, %v460
    %v473 = vpack.c.bf16 %v463, %v462
    %474 = vmatpush.bf16.msra.mxu0 %v473
    %475 = vmatpush.bf16.msra.mxu0 %v472
    %476 = vmatpush.bf16.msra.mxu0 %v471
    %477 = vmatpush.bf16.msra.mxu0 %v470
    %478 = vmatpush.bf16.msra.mxu0 %v469
    %479 = vmatpush.bf16.msra.mxu0 %v468
    %480 = vmatpush.bf16.msra.mxu0 %v467
    %481 = vmatpush.bf16.msra.mxu0 %v466
    %482 = vmatmul.bf16.gmra.mxu0 %v465
    %v483 = vpop.f32.mrf.mxu0
    %v484 = vadd.f32 0.0, %v483
    %v485 = vpop.f32.mrf.mxu0
    %486 = vdwg.mxu0
    %v487 = vadd.f32 %v464, %v484
    %488 = vst [vmem:[#allocation2] sm:$0xff] %v487
    %v489 = vld [vmem:[#allocation3] sm:$0x1]
    %v490 = vadd.f32 %v448, %v449
    %v491 = vadd.f32 %v490, %v450
    %v492 = vadd.f32 %v491, %v451
    %v493 = vadd.f32 %v492, %v452
    %v494 = vadd.f32 %v493, %v453
    %v495 = vadd.f32 %v494, %v454
    %v496 = vadd.f32 %v495, %v455
    %v497 = vadd.f32 %v496, %v456
    %v498 = vadd.f32 %v497, %v457
    %v499 = vadd.f32 %v498, %v458
    %v500 = vadd.f32 %v499, %v459
    %v501 = vadd.f32 %v500, %v460
    %v502 = vadd.f32 %v501, %v461
    %v503 = vadd.f32 %v502, %v462
    %v504 = vadd.f32 %v503, %v463
    %v505 = vrot.slane %v504, 4
    %v506 = vadd.f32 %v504, %v505
    %v507 = vrot.slane %v506, 2
    %v508 = vadd.f32 %v506, %v507
    %v509 = vrot.slane %v508, 1
    %v510 = vadd.f32 %v508, %v509
    %v511 = vadd.f32 %v489, %v510
    %512 = vst [vmem:[#allocation3] sm:$0x1] %v511
    // Predicated region
    $region30: #{tpu_custom_call.1} parent=1 // pred_check
      %p513 = pneg %p24
    $region31: #{tpu_custom_call.1} parent=1 // pred_check_branch
      %515 = sbr.rel (%p513) target = $region33
    $region32: #{tpu_custom_call.1} parent=1 // pred_region
      %v516 = vld [vmem:[#allocation3] sm:$0x1]
      %v517 = vmax.f32 %v516, 1.0
      %v518 = vrcp.pop %v517
      %v519 = vld [vmem:[#allocation2] sm:$0xff]
      %v521 = vperm.slane %v518, 0
      %v523 = vmul.f32 %v519, %v521
      %524 = vst [vmem:[#allocation4] sm:$0xff] %v523
    $region33: #{tpu_custom_call.1} parent=1 // pred_fallthru
      _
    // Predicated region
    $region34: #{tpu_custom_call.1} parent=1 // pred_check
      _
    $region35: #{tpu_custom_call.1} parent=1 // pred_check_branch
      %526 = sbr.rel (0) target = $region37
    $region36: #{tpu_custom_call.1} parent=1 // pred_region
      %528 = vsyncadd [#allocation5], 0
      %s530 = sshll.u32 [#allocation4], 4
      %s531 = int_to_ptr.vmem [resolvable:$true] %s530
      %s532 = sshll.u32 %s6, 4
      %s533 = int_to_ptr.hbm [resolvable:$true] %s532
      %535 = dma.vmem_to_hbm [thread:$0]  %s531, 128, %s533, [#allocation5]
    $region37: #{tpu_custom_call.1} parent=1 // pred_fallthru
      _
    // Predicated region
    $region38: #{tpu_custom_call.1} parent=1 // pred_check
      _
    $region39: #{tpu_custom_call.1} parent=1 // pred_check_branch
      %537 = sbr.rel (0) target = $region41
    $region40: #{tpu_custom_call.1} parent=1 // pred_region
      %539 = dma.done [#allocation5], 128
    $region41: #{tpu_custom_call.1} parent=1 // pred_fallthru
      _
    %540 = vsyncpa [#allocation5], 1

</llo_original>
